<compile_context>
chip_gen: v7x
topology: tpu7x:2x2x1
jax: 0.10.0
libtpu: 0.0.40
codegen_flags: <defaults>
</compile_context>

<pallas_src>
import math

import jax
import jax.numpy as jnp
from jax.experimental import pallas as pl
from jax.experimental.pallas import tpu as pltpu


_LANES = 128                              # lane width; total % 128 == 0 keeps the
                                          # flat -> 2-D reshape a zero-copy bitcast.
_TARGET_BLOCK_BYTES = 8 * 1024 * 1024     # pred+true bytes per grid step (4 MiB each for f32).
_VMEM_LIMIT_BYTES = 32 * 1024 * 1024      # 2 inputs x 2 buffers x 4 MiB = 16 MiB of pipeline
                                          # buffers; 32 MiB is <= physical VMEM on v5e/v6e/v7x.
_MIN_PALLAS_ELEMS = 1024                  # below ~one (8,128) tile, plain XLA is faster.


def _round_up(x, m):
    return ((x + m - 1) // m) * m


def _make_block_sum_kernel(row_tile, rows_valid):
    """|pred - true| lane-wise partial sum over one (row_tile, 128) block."""
    partial_last = (rows_valid % row_tile) != 0

    def kernel(pred_ref, true_ref, out_ref):
        # Memory-bound: cast to f32 on load (v5e VPU has no bf16 ops); all the
        # VPU work hides under the input DMA.
        d = jnp.abs(pred_ref[...].astype(jnp.float32)
                    - true_ref[...].astype(jnp.float32))
        if partial_last:
            # The last grid block overhangs the array; Pallas pads it with
            # unspecified values.  Zero those rows with a select (a garbage
            # NaN in the pad region cannot propagate through jnp.where).
            row0 = pl.program_id(0) * row_tile
            rid = jax.lax.broadcasted_iota(jnp.int32, d.shape, 0)
            d = jnp.where(rid < (rows_valid - row0), d, 0.0)
        # Sublane-only reduce -> lane-dense (1, 128) partial.  The cross-lane
        # reduce happens once in the wrapper, keeping the per-step epilogue to
        # a VPU reduce + one unmasked lane-dense store.
        out_ref[...] = jnp.sum(d, axis=0, keepdims=True)

    return kernel


def lai_mae(y_pred: jax.Array, y_true: jax.Array, factor: float = 0.5) -> jax.Array:
    """Adaptive MAE loss, semantics matching fedcore LaiMAE.forward."""
    assert y_pred.shape == y_true.shape
    n = y_pred.shape[0]            # y_pred.size(0)
    total = y_pred.size            # mean over all elements

    # ---- compile-time constant weight (see header comment) --------------
    inv_n = 1.0 / float(n)
    denom = math.sqrt(1.0 + inv_n * inv_n)
    if factor >= 1:                # static Python branch, mirrors the module
        weight_const = max(inv_n, float(factor)) / denom
    else:
        weight_const = max(inv_n / float(factor), 1.0) / denom
    scale = jnp.float32(weight_const / float(total))

    flat_p = y_pred.reshape(-1)    # contiguous -> bitcast, no copy
    flat_t = y_true.reshape(-1)

    # ---- tiny-input bypass: launch/step overhead would dominate ---------
    if total < _MIN_PALLAS_ELEMS:
        s = jnp.sum(jnp.abs(flat_p.astype(jnp.float32) - flat_t.astype(jnp.float32)))
        return s * scale

    # ---- sub-128 tail in plain XLA so the kernel view is copy-free ------
    rem = total % _LANES
    main_len = total - rem
    tail_sum = jnp.float32(0.0)
    if rem:
        tail_sum = jnp.sum(jnp.abs(flat_p[main_len:].astype(jnp.float32)
                                   - flat_t[main_len:].astype(jnp.float32)))
        # NOTE: the prefix slice below may materialize a copy only in the
        # (rare) non-128-aligned case; the aligned case never copies.
        flat_p = flat_p[:main_len]
        flat_t = flat_t[:main_len]

    rows = main_len // _LANES
    p2d = flat_p.reshape(rows, _LANES)     # bitcast when total % 128 == 0
    t2d = flat_t.reshape(rows, _LANES)

    # ---- dtype-aware block sizing (~4 MiB per input per step) -----------
    isz_p = jnp.dtype(y_pred.dtype).itemsize
    isz_t = jnp.dtype(y_true.dtype).itemsize
    sub_mult = max(8, 32 // max(1, min(isz_p, isz_t)))   # 8 f32, 16 bf16, 32 int8
    row_tile_max = _TARGET_BLOCK_BYTES // (_LANES * (isz_p + isz_t))
    row_tile_max = max(sub_mult, (row_tile_max // sub_mult) * sub_mult)
    row_tile = min(row_tile_max, _round_up(rows, sub_mult))
    num_blocks = -(-rows // row_tile)

    kernel = _make_block_sum_kernel(row_tile, rows)

    cost = pl.CostEstimate(
        flops=3 * main_len,                                   # sub + abs + add
        transcendentals=0,
        bytes_accessed=main_len * (isz_p + isz_t) + num_blocks * _LANES * 4,
    )

    partials = pl.pallas_call(
        kernel,
        out_shape=jax.ShapeDtypeStruct((num_blocks, _LANES), jnp.float32),
        grid_spec=pltpu.PrefetchScalarGridSpec(
            num_scalar_prefetch=0,
            grid=(num_blocks,),
            in_specs=[
                pl.BlockSpec((row_tile, _LANES), lambda i: (i, 0)),
                pl.BlockSpec((row_tile, _LANES), lambda i: (i, 0)),
            ],
            out_specs=pl.BlockSpec((1, _LANES), lambda i: (i, 0)),
        ),
        compiler_params=pltpu.CompilerParams(
            # Independent per-block partials: no carried state, so the grid
            # axis is parallel (harmless on single-TC v5e/v6e).
            dimension_semantics=("parallel",),
            vmem_limit_bytes=_VMEM_LIMIT_BYTES,
        ),
        cost_estimate=cost,
    )(p2d, t2d)

    return (jnp.sum(partials) + tail_sum) * scale


def lai_mae_ref(y_pred, y_true, factor=0.5):
    """Pure-JAX reference mirroring the PyTorch module exactly."""
    residuals = y_pred.astype(jnp.float32) - y_true.astype(jnp.float32)
    n = y_pred.shape[0]
    mae_term = jnp.abs(residuals)
    k_i = jnp.sign(residuals) / n
    k_i_sq = k_i ** 2
    k_i_abs = jnp.abs(k_i)
    denom = jnp.sqrt(1 + k_i_sq)
    if factor >= 1:
        term1 = k_i_abs / denom
        term2 = factor / denom
    else:
        term1 = k_i_abs / (factor * denom)
        term2 = 1 / denom
    weight = jnp.maximum(term1, term2)
    return jnp.mean(mae_term * weight)


if __name__ == "__main__":
    key = jax.random.PRNGKey(0)
    k1, k2, k3, k4 = jax.random.split(key, 4)

    # Primary example: (N, C, H, W) = (2, 4, 16, 16) -> 2048 elements,
    # 128-aligned -> zero-copy kernel path.
    y_pred = jax.random.normal(k1, (2, 4, 16, 16), dtype=jnp.float32)
    y_true = jax.random.normal(k2, (2, 4, 16, 16), dtype=jnp.float32)

    loss = jax.block_until_ready(lai_mae(y_pred, y_true, factor=0.5))
    ref = lai_mae_ref(y_pred, y_true, factor=0.5)
    assert jnp.allclose(loss, ref, rtol=1e-5, atol=1e-6), (loss, ref)

    # factor >= 1 static branch on the same data.
    loss2 = jax.block_until_ready(lai_mae(y_pred, y_true, factor=2.0))
    ref2 = lai_mae_ref(y_pred, y_true, factor=2.0)
    assert jnp.allclose(loss2, ref2, rtol=1e-5, atol=1e-6), (loss2, ref2)

    # Non-128-aligned size (5*3*37*8 = 4440): exercises the XLA tail path and
    # the in-kernel row mask for the partial last block.
    yp3 = jax.random.normal(k3, (5, 3, 37, 8), dtype=jnp.float32)
    yt3 = jax.random.normal(k4, (5, 3, 37, 8), dtype=jnp.float32)
    loss3 = jax.block_until_ready(lai_mae(yp3, yt3, factor=0.5))
    ref3 = lai_mae_ref(yp3, yt3, factor=0.5)
    assert jnp.allclose(loss3, ref3, rtol=1e-5, atol=1e-6), (loss3, ref3)

    print("KERNEL_OK")
</pallas_src>

<mosaic_0001>
module attributes {stable_mosaic.version = 11 : i64} {
  func.func @kernel(%arg0: i32, %arg1: memref<16x128xf32, #tpu.memory_space<vmem>>, %arg2: memref<16x128xf32, #tpu.memory_space<vmem>>, %arg3: memref<1x128xf32, #tpu.memory_space<vmem>>) attributes {dimension_semantics = [#tpu.dimension_semantics<parallel>], iteration_bounds = array<i64: 1>, scalar_prefetch = 0 : i64, scratch_operands = 0 : i64, tpu.core_type = #tpu.core_type<tc>, window_params = [{transform_indices = @transform_0, window_bounds = array<i64: 16, 128>}, {transform_indices = @transform_1, window_bounds = array<i64: 16, 128>}, {transform_indices = @transform_2, window_bounds = array<i64: 1, 128>}]} {
    %c0 = arith.constant 0 : index
    %c0_0 = arith.constant 0 : index
    %0 = vector.load %arg1[%c0, %c0_0] : memref<16x128xf32, #tpu.memory_space<vmem>>, vector<16x128xf32>
    %c0_1 = arith.constant 0 : index
    %c0_2 = arith.constant 0 : index
    %1 = vector.load %arg2[%c0_1, %c0_2] : memref<16x128xf32, #tpu.memory_space<vmem>>, vector<16x128xf32>
    %2 = arith.subf %0, %1 : vector<16x128xf32>
    %3 = math.absf %2 : vector<16x128xf32>
    %cst = arith.constant dense<0.000000e+00> : vector<128xf32>
    %4 = vector.multi_reduction <add>, %3, %cst [0] : vector<16x128xf32> to vector<128xf32>
    %5 = vector.shape_cast %4 : vector<128xf32> to vector<1x128xf32>
    %c0_3 = arith.constant 0 : index
    %c0_4 = arith.constant 0 : index
    %6 = vector.load %arg3[%c0_3, %c0_4] : memref<1x128xf32, #tpu.memory_space<vmem>>, vector<1x128xf32>
    tpu.vector_store %arg3[%c0_3, %c0_4], %5 {strides = array<i32>} : memref<1x128xf32, #tpu.memory_space<vmem>>, vector<1x128xf32>,
    return
  }
  func.func @transform_0(%arg0: i32) -> (i32, i32) {
    %c0_i32 = arith.constant 0 : i32
    %c0_i32_0 = arith.constant 0 : i32
    return %arg0, %c0_i32 : i32, i32
  }
  func.func @transform_1(%arg0: i32) -> (i32, i32) {
    %c0_i32 = arith.constant 0 : i32
    %c0_i32_0 = arith.constant 0 : i32
    return %arg0, %c0_i32 : i32, i32
  }
  func.func @transform_2(%arg0: i32) -> (i32, i32) {
    %c0_i32 = arith.constant 0 : i32
    %c0_i32_0 = arith.constant 0 : i32
    return %arg0, %c0_i32 : i32, i32
  }
}

</mosaic_0001>

<llo_original>
// kernel: tpu_custom_call.1
$region0: #{tpu_custom_call.1}
  #allocation0 [shape = 'u32[]', space=smem, size = 0x4, offset = 0x4, fixed_abs, tag = 'smem constant byte address 0x4 - core index']
  #allocation1 [shape = 'u32[144,128]{1,0:T(1,128)}', space=vmem, size = 0x12000, scoped, tag = 'internal scratch']
  %s0 = inlined_call_operand.hbm [shape: f32[16,128], index: 0, kind: input, shape index: {}]
  %s1 = inlined_call_operand.hbm [shape: f32[16,128], index: 1, kind: input, shape index: {}]
  %s2 = inlined_call_operand.hbm [shape: f32[1,128], index: 2, kind: output, shape index: {}]
  %s3 = sld [smem:[#allocation0]]
  $region26: #{tpu_custom_call.1} parent=0
    _
  %s5 = ssub.s32 1, %s3
  %s6 = scalar_select 0, %s5, %s3
  $region1: #{tpu_custom_call.1} parent=0
    #allocation2 [shape = 'u8[8192]{0}', space=vmem, size = 0x2000, scoped, tag = 'input window, operand 0, single buffered']
    #allocation3 [shape = 's32[1]{0}', space=sflag, size = 0x4, scoped, tag = 'scoped memory for tpu_custom_call.1']
    #allocation4 [shape = 's32[1]{0}', space=sflag, size = 0x4, scoped, tag = 'scoped memory for tpu_custom_call.1']
    #allocation5 [shape = 'u8[8192]{0}', space=vmem, size = 0x2000, scoped, tag = 'input window, operand 1, single buffered']
    #allocation6 [shape = 's32[1]{0}', space=sflag, size = 0x4, scoped, tag = 'scoped memory for tpu_custom_call.1']
    #allocation7 [shape = 'u8[512]{0}', space=vmem, size = 0x400, scoped, tag = 'output window, operand 0, single buffered']
    %7 = vsyncpa [#allocation3], 0
    %8 = vsyncpa [#allocation6], 0
    %9 = vsyncpa [#allocation4], 0
    // Predicated region
    $region2: #{tpu_custom_call.1} parent=1 // pred_check
      _
    $region3: #{tpu_custom_call.1} parent=1 // pred_check_branch
      %11 = sbr.rel (0) target = $region5
    $region4: #{tpu_custom_call.1} parent=1 // pred_region
      %s13 = ssub.s32 256, 256
      %14 = vsyncadd [#allocation3], %s13
      %s15 = sshll.u32 [#allocation2], 4
      %s16 = int_to_ptr.vmem [resolvable:$true] %s15
      %21 = dma.hbm_to_vmem [thread:$0]  %s0, 256, %s16, [#allocation3], 128, 128, 8
    $region5: #{tpu_custom_call.1} parent=1 // pred_fallthru
      _
    // Predicated region
    $region6: #{tpu_custom_call.1} parent=1 // pred_check
      _
    $region7: #{tpu_custom_call.1} parent=1 // pred_check_branch
      %23 = sbr.rel (0) target = $region9
    $region8: #{tpu_custom_call.1} parent=1 // pred_region
      %s25 = ssub.s32 256, 256
      %26 = vsyncadd [#allocation6], %s25
      %s27 = sshll.u32 [#allocation5], 4
      %s28 = int_to_ptr.vmem [resolvable:$true] %s27
      %33 = dma.hbm_to_vmem [thread:$0]  %s1, 256, %s28, [#allocation6], 128, 128, 8
    $region9: #{tpu_custom_call.1} parent=1 // pred_fallthru
      _
    // Predicated region
    $region10: #{tpu_custom_call.1} parent=1 // pred_check
      _
    $region11: #{tpu_custom_call.1} parent=1 // pred_check_branch
      %35 = sbr.rel (0) target = $region13
    $region12: #{tpu_custom_call.1} parent=1 // pred_region
      %36 = dma.done [#allocation3], 256
    $region13: #{tpu_custom_call.1} parent=1 // pred_fallthru
      _
    // Predicated region
    $region14: #{tpu_custom_call.1} parent=1 // pred_check
      _
    $region15: #{tpu_custom_call.1} parent=1 // pred_check_branch
      %38 = sbr.rel (0) target = $region17
    $region16: #{tpu_custom_call.1} parent=1 // pred_region
      %39 = dma.done [#allocation6], 256
    $region17: #{tpu_custom_call.1} parent=1 // pred_fallthru
      _
    %v40 = vld [vmem:[#allocation2] sm:$0xff]
    %v41 = vld [vmem:[#allocation2 + $0x8] sm:$0xff]
    %v42 = vld [vmem:[#allocation5] sm:$0xff]
    %v43 = vld [vmem:[#allocation5 + $0x8] sm:$0xff]
    %v44 = vsub.f32 %v40, %v42
    %v45 = vsub.f32 %v41, %v43
    %v46 = vand.u32 2147483647, %v44
    %v47 = vand.u32 2147483647, %v45
    %v48 = vadd.f32 %v46, %v47
    %v49 = vrot.slane %v48, 4
    %v50 = vadd.f32 %v48, %v49
    %v51 = vrot.slane %v50, 2
    %v52 = vadd.f32 %v50, %v51
    %v53 = vrot.slane %v52, 1
    %v54 = vadd.f32 %v52, %v53
    %55 = vst [vmem:[#allocation7] sm:$0x1] %v54
    // Predicated region
    $region18: #{tpu_custom_call.1} parent=1 // pred_check
      _
    $region19: #{tpu_custom_call.1} parent=1 // pred_check_branch
      %57 = sbr.rel (0) target = $region21
    $region20: #{tpu_custom_call.1} parent=1 // pred_region
      %s59 = ssub.s32 16, 16
      %60 = vsyncadd [#allocation4], %s59
      %s62 = sshll.u32 [#allocation7], 4
      %s63 = int_to_ptr.vmem [resolvable:$true] %s62
      %65 = dma.vmem_to_hbm [thread:$0]  %s63, 16, %s2, [#allocation4]
    $region21: #{tpu_custom_call.1} parent=1 // pred_fallthru
      _
    // Predicated region
    $region22: #{tpu_custom_call.1} parent=1 // pred_check
      _
    $region23: #{tpu_custom_call.1} parent=1 // pred_check_branch
      %67 = sbr.rel (0) target = $region25
    $region24: #{tpu_custom_call.1} parent=1 // pred_region
      %68 = dma.done [#allocation4], 16
    $region25: #{tpu_custom_call.1} parent=1 // pred_fallthru
      _
    %69 = vsyncpa [#allocation3], 1
    %70 = vsyncpa [#allocation6], 1
    %71 = vsyncpa [#allocation4], 1

</llo_original>
